<compile_context>
chip_gen: v7x
topology: tpu7x:2x2x1
jax: 0.10.0
libtpu: 0.0.40
codegen_flags: <defaults>
</compile_context>

<pallas_src>
import functools

import jax
import jax.numpy as jnp
from jax.experimental import pallas as pl
from jax.experimental.pallas import tpu as pltpu  # noqa: F401  (no TPU-specific params needed at these sizes)


# Slab-segment row alignment: a multiple of the sublane packing of f32 (8),
# bf16 (16) and int8/fp8 (32), so every static slice inside the kernel starts
# on a packed-tile row boundary.
_SEG_ALIGN = 32


def _round_up(x, m):
    return (x + m - 1) // m * m


def _covnet_deep_kernel(u_ref, w_ref, b_ref, o_ref, *,
                        num_hidden, P, d, N,
                        off_wh, off_wout, off_wf, off_w1):
    """Whole CovNetDeep forward for all R sub-nets in one invocation.

    u_ref: (B, d)   f32   batch input
    w_ref: (rows,P)       packed weight slab (bf16 fast path or f32)
    b_ref: (nh+2,P) f32   packed bias slab [b1 | bh_0..bh_{nh-1} | bout(pad)]
    o_ref: (N, B)   f32   output, written directly in the final (N, B) form
    """
    f32 = jnp.float32

    # --- layer1 of all R sub-nets in one MXU pass: (B, d) @ (d, P) -> (B, P) --
    w1 = w_ref[off_w1:off_w1 + d, :]
    wdt = w1.dtype                       # MXU operand dtype (bf16 on fast path)
    h = jax.nn.sigmoid(
        jnp.dot(u_ref[...].astype(wdt), w1, preferred_element_type=f32)
        + b_ref[0:1, :])                 # bias + sigmoid stay in f32 (VPU/EUP)

    # --- hidden layers: block-diagonal (P, P), one lane-dense MXU pass each --
    for i in range(num_hidden):          # static unroll, num_hidden is tiny
        wh = w_ref[off_wh + i * P: off_wh + (i + 1) * P, :]
        h = jax.nn.sigmoid(
            jnp.dot(h.astype(wdt), wh, preferred_element_type=f32)
            + b_ref[1 + i:2 + i, :])

    # --- per-net scalar heads folded into one (B, P) @ (P, P) pass ----------
    # Columns >= R carry zero weight; their sigmoid(0)=0.5 junk is annihilated
    # by the zero columns of the padded final-layer weight below.
    wout = w_ref[off_wout:off_wout + P, :]
    feat = jax.nn.sigmoid(
        jnp.dot(h.astype(wdt), wout, preferred_element_type=f32)
        + b_ref[num_hidden + 1:num_hidden + 2, :])           # (B, P)

    # --- final_layer (no bias), emitted directly as (N, B) ------------------
    # (N, P) @ (P, B): batch lands on lanes -> lane-dense output stores; the
    # tiny feat transpose is one XLU op, free under MXU/DMA latency.
    wf = w_ref[off_wf:off_wf + N, :]
    feat_t = feat.T.astype(wdt)                              # (P, B)
    o_ref[...] = jnp.dot(wf, feat_t,
                         preferred_element_type=f32).astype(o_ref.dtype)


def pack_covnet_deep_params(W1, b1, Wh, bh, Wout, bout, Wf, *, depth,
                            weight_dtype=jnp.bfloat16):
    """One-time packing of PyTorch-shaped CovNetDeep parameters (hoisted out of
    the per-forward path; the block-diagonal builds cost more than the kernel
    itself if redone every call).

    PyTorch-shaped inputs:
      W1 (R, n_nodes, d), b1 (R, 1, n_nodes), Wh (R, >=nh, n_nodes, n_nodes),
      bh (R, >=nh, 1, n_nodes), Wout (R, 1, n_nodes), bout (R, 1, 1), Wf (N, R).
    Returns dict(wslab, bias, static) consumed by covnet_deep_forward.
    """
    f32 = jnp.float32
    R, n_nodes, d = W1.shape
    N = Wf.shape[0]
    nh = depth - 2
    P = R * n_nodes

    # One-time layout assertions so a parameter-shape change cannot silently
    # desync the packed column layout (r * n_nodes + j) used by the kernel.
    assert b1.shape == (R, 1, n_nodes), b1.shape
    assert Wout.shape == (R, 1, n_nodes), Wout.shape
    assert bout.shape == (R, 1, 1), bout.shape
    assert Wf.shape == (N, R), Wf.shape
    if nh > 0:
        assert (Wh.shape[0] == R and Wh.shape[1] >= nh
                and Wh.shape[2:] == (n_nodes, n_nodes)), Wh.shape
        assert (bh.shape[0] == R and bh.shape[1] >= nh
                and bh.shape[2:] == (1, n_nodes)), bh.shape

    eye_r = jnp.eye(R, dtype=f32)

    # --- weight slab: segments all shaped (rows, P), rows padded to alignment -
    segs = []
    cursor = 0

    def add_seg(arr):
        nonlocal cursor
        rows = arr.shape[0]
        rows_p = _round_up(rows, _SEG_ALIGN)
        if rows_p != rows:
            arr = jnp.concatenate(
                [arr, jnp.zeros((rows_p - rows, arr.shape[1]), arr.dtype)], axis=0)
        segs.append(arr)
        off = cursor
        cursor += rows_p
        return off

    # hidden layers, block-diagonal and pre-transposed for `h @ W`:
    #   WhBD[i, r*n + b, s*n + a] = delta(r, s) * Wh[r, i, a, b]
    if nh > 0:
        WhBD = jnp.einsum('rs,riab->irbsa', eye_r,
                          Wh[:, :nh].astype(f32)).reshape(nh * P, P)
        off_wh = add_seg(WhBD)
    else:
        off_wh = 0

    # per-net scalar heads folded into a block-structured (P, R) matrix,
    # lane-padded to (P, P):  WoutBD[r*n + j, r] = Wout[r, 0, j]
    WoutBD = jnp.einsum('rs,rj->rjs', eye_r,
                        Wout[:, 0, :].astype(f32)).reshape(P, R)
    off_wout = add_seg(jnp.zeros((P, P), f32).at[:, :R].set(WoutBD))

    # final_layer weight, lane-padded to (N, P) (zero columns kill the junk
    # head columns >= R).
    off_wf = add_seg(jnp.zeros((N, P), f32).at[:, :R].set(Wf.astype(f32)))

    # layer1 weights packed as columns: W1cols[k, r*n + j] = W1[r, j, k]
    off_w1 = add_seg(jnp.transpose(W1.astype(f32).reshape(P, d)))

    wslab = jnp.concatenate(segs, axis=0).astype(weight_dtype)

    # --- bias slab (nh + 2, P), f32 ------------------------------------------
    rows = [b1.astype(f32).reshape(1, P)]
    if nh > 0:
        rows.append(jnp.transpose(bh[:, :nh, 0, :].astype(f32),
                                  (1, 0, 2)).reshape(nh, P))
    rows.append(jnp.zeros((1, P), f32).at[0, :R].set(bout.astype(f32).reshape(R)))
    bias_slab = jnp.concatenate(rows, axis=0)

    return {
        'wslab': wslab,
        'bias': bias_slab,
        'static': dict(num_hidden=nh, P=P, d=d, N=N,
                       off_wh=off_wh, off_wout=off_wout,
                       off_wf=off_wf, off_w1=off_w1),
    }


def covnet_deep_forward(u, packed):
    """u: (B, d) float32 -> (N, B) float32, identical to CovNetDeep.forward(u)."""
    B, d = u.shape
    static = packed['static']
    assert d == static['d'], (d, static['d'])
    kernel = functools.partial(_covnet_deep_kernel, **static)
    # Gridless single invocation: 3 input DMAs (u, weight slab, bias slab),
    # 1 output store; everything VMEM-resident.
    return pl.pallas_call(
        kernel,
        out_shape=jax.ShapeDtypeStruct((static['N'], B), jnp.float32),
    )(u, packed['wslab'], packed['bias'])


if __name__ == "__main__":
    # Small shapes consistent with the module's forward: u is (batch, d).
    # R * n_nodes = 128 -> the packed hidden matmuls are exactly lane-dense.
    B, d, N, R, depth, n_nodes = 16, 4, 8, 4, 3, 32

    key = jax.random.PRNGKey(0)
    k_u, k_w1, k_wh, k_wout, k_wf = jax.random.split(key, 5)

    def xavier_normal(k, shape):
        # xavier_normal_ over the trailing (fan_out, fan_in) matrix dims
        fan_out, fan_in = shape[-2], shape[-1]
        std = (2.0 / (fan_in + fan_out)) ** 0.5
        return std * jax.random.normal(k, shape, jnp.float32)

    nh_store = max(depth - 2, 1)  # storage size (>=1 so arrays are non-empty)
    u = jax.random.normal(k_u, (B, d), jnp.float32)

    W1 = xavier_normal(k_w1, (R, n_nodes, d))              # layer1.weight per model
    b1 = jnp.zeros((R, 1, n_nodes), jnp.float32)           # layer1.bias (zeros)
    Wh = xavier_normal(k_wh, (R, nh_store, n_nodes, n_nodes))
    bh = jnp.zeros((R, nh_store, 1, n_nodes), jnp.float32)
    Wout = xavier_normal(k_wout, (R, 1, n_nodes))          # last cnet layer weight
    bout = jnp.zeros((R, 1, 1), jnp.float32)               # last cnet layer bias
    Wf = xavier_normal(k_wf, (N, R))                       # final_layer.weight

    # Pack ONCE (hoisted out of the per-forward path).  bf16 MXU operands for
    # the fast path; an f32-packed copy is kept for exact validation.
    packed_bf16 = pack_covnet_deep_params(W1, b1, Wh, bh, Wout, bout, Wf,
                                          depth=depth, weight_dtype=jnp.bfloat16)
    packed_f32 = pack_covnet_deep_params(W1, b1, Wh, bh, Wout, bout, Wf,
                                         depth=depth, weight_dtype=jnp.float32)

    out = jax.block_until_ready(covnet_deep_forward(u, packed_bf16))
    out_f32 = jax.block_until_ready(covnet_deep_forward(u, packed_f32))
    assert out.shape == (N, B), out.shape

    # Pure-JAX reference reproducing CovNetDeep.forward exactly.
    def reference(u):
        feats = []
        for r in range(R):
            h = 1.0 / (1.0 + jnp.exp(-(u @ W1[r].T + b1[r])))
            for i in range(depth - 2):
                h = 1.0 / (1.0 + jnp.exp(-(h @ Wh[r, i].T + bh[r, i])))
            s = 1.0 / (1.0 + jnp.exp(-(h @ Wout[r].T + bout[r])))   # (B, 1)
            feats.append(s)
        feat = jnp.concatenate(feats, axis=1)                        # (B, R)
        return (feat @ Wf.T).T                                       # (N, B)

    ref = jax.block_until_ready(reference(u))

    # f32-packed path must match to float precision; the bf16-operand fast
    # path (f32 accumulation) matches at bf16-level tolerance.
    assert jnp.allclose(out_f32, ref, atol=1e-5, rtol=1e-5), \
        float(jnp.max(jnp.abs(out_f32 - ref)))
    assert jnp.allclose(out, ref, atol=3e-2, rtol=3e-2), \
        float(jnp.max(jnp.abs(out - ref)))

    print("KERNEL_OK")
</pallas_src>

<mosaic_0001>
module attributes {stable_mosaic.version = 11 : i64} {
  func.func @_covnet_deep_kernel(%arg0: memref<16x4xf32, #tpu.memory_space<vmem>>, %arg1: memref<320x128xbf16, #tpu.memory_space<vmem>>, %arg2: memref<3x128xf32, #tpu.memory_space<vmem>>, %arg3: memref<8x16xf32, #tpu.memory_space<vmem>>) attributes {dimension_semantics = [], scalar_prefetch = 0 : i64, scratch_operands = 0 : i64, tpu.core_type = #tpu.core_type<tc>} {
    %c288 = arith.constant 288 : index
    %c0 = arith.constant 0 : index
    %0 = vector.load %arg1[%c288, %c0] : memref<320x128xbf16, #tpu.memory_space<vmem>>, vector<4x128xbf16>
    %c0_0 = arith.constant 0 : index
    %c0_1 = arith.constant 0 : index
    %1 = vector.load %arg0[%c0_0, %c0_1] : memref<16x4xf32, #tpu.memory_space<vmem>>, vector<16x4xf32>
    %2 = arith.truncf %1 : vector<16x4xf32> to vector<16x4xbf16>
    %cst = arith.constant dense<0.000000e+00> : vector<16x128xf32>
    %3 = tpu.matmul %2, %0, %cst {dimension_numbers = #tpu.dot_dimension_numbers<[1], [0], [0], [1], [0, 0, 1, 1], [], []>} : vector<16x4xbf16>, vector<4x128xbf16>, vector<16x128xf32> -> vector<16x128xf32>
    %c0_2 = arith.constant 0 : index
    %c0_3 = arith.constant 0 : index
    %4 = vector.load %arg2[%c0_2, %c0_3] : memref<3x128xf32, #tpu.memory_space<vmem>>, vector<1x128xf32>
    %5 = vector.broadcast %4 : vector<1x128xf32> to vector<16x128xf32>
    %6 = arith.addf %3, %5 : vector<16x128xf32>
    %7 = arith.negf %6 : vector<16x128xf32>
    %8 = math.exp %7 : vector<16x128xf32>
    %cst_4 = arith.constant 1.000000e+00 : f32
    %9 = vector.broadcast %cst_4 : f32 to vector<16x128xf32>
    %10 = arith.addf %9, %8 : vector<16x128xf32>
    %11 = arith.divf %9, %10 : vector<16x128xf32>
    %c0_5 = arith.constant 0 : index
    %c0_6 = arith.constant 0 : index
    %12 = vector.load %arg1[%c0_5, %c0_6] : memref<320x128xbf16, #tpu.memory_space<vmem>>, vector<128x128xbf16>
    %13 = arith.truncf %11 : vector<16x128xf32> to vector<16x128xbf16>
    %cst_7 = arith.constant dense<0.000000e+00> : vector<16x128xf32>
    %14 = tpu.matmul %13, %12, %cst_7 {dimension_numbers = #tpu.dot_dimension_numbers<[1], [0], [0], [1], [0, 0, 1, 1], [], []>} : vector<16x128xbf16>, vector<128x128xbf16>, vector<16x128xf32> -> vector<16x128xf32>
    %c1 = arith.constant 1 : index
    %c0_8 = arith.constant 0 : index
    %15 = vector.load %arg2[%c1, %c0_8] : memref<3x128xf32, #tpu.memory_space<vmem>>, vector<1x128xf32>
    %16 = vector.broadcast %15 : vector<1x128xf32> to vector<16x128xf32>
    %17 = arith.addf %14, %16 : vector<16x128xf32>
    %18 = arith.negf %17 : vector<16x128xf32>
    %19 = math.exp %18 : vector<16x128xf32>
    %cst_9 = arith.constant 1.000000e+00 : f32
    %20 = vector.broadcast %cst_9 : f32 to vector<16x128xf32>
    %21 = arith.addf %20, %19 : vector<16x128xf32>
    %22 = arith.divf %20, %21 : vector<16x128xf32>
    %c128 = arith.constant 128 : index
    %c0_10 = arith.constant 0 : index
    %23 = vector.load %arg1[%c128, %c0_10] : memref<320x128xbf16, #tpu.memory_space<vmem>>, vector<128x128xbf16>
    %24 = arith.truncf %22 : vector<16x128xf32> to vector<16x128xbf16>
    %cst_11 = arith.constant dense<0.000000e+00> : vector<16x128xf32>
    %25 = tpu.matmul %24, %23, %cst_11 {dimension_numbers = #tpu.dot_dimension_numbers<[1], [0], [0], [1], [0, 0, 1, 1], [], []>} : vector<16x128xbf16>, vector<128x128xbf16>, vector<16x128xf32> -> vector<16x128xf32>
    %c2 = arith.constant 2 : index
    %c0_12 = arith.constant 0 : index
    %26 = vector.load %arg2[%c2, %c0_12] : memref<3x128xf32, #tpu.memory_space<vmem>>, vector<1x128xf32>
    %27 = vector.broadcast %26 : vector<1x128xf32> to vector<16x128xf32>
    %28 = arith.addf %25, %27 : vector<16x128xf32>
    %29 = arith.negf %28 : vector<16x128xf32>
    %30 = math.exp %29 : vector<16x128xf32>
    %cst_13 = arith.constant 1.000000e+00 : f32
    %31 = vector.broadcast %cst_13 : f32 to vector<16x128xf32>
    %32 = arith.addf %31, %30 : vector<16x128xf32>
    %33 = arith.divf %31, %32 : vector<16x128xf32>
    %c256 = arith.constant 256 : index
    %c0_14 = arith.constant 0 : index
    %34 = vector.load %arg1[%c256, %c0_14] : memref<320x128xbf16, #tpu.memory_space<vmem>>, vector<8x128xbf16>
    %35 = tpu.transpose %33, [1, 0] : vector<16x128xf32> -> vector<128x16xf32>
    %36 = arith.truncf %35 : vector<128x16xf32> to vector<128x16xbf16>
    %cst_15 = arith.constant dense<0.000000e+00> : vector<8x16xf32>
    %37 = tpu.matmul %34, %36, %cst_15 {dimension_numbers = #tpu.dot_dimension_numbers<[1], [0], [0], [1], [0, 0, 1, 1], [], []>} : vector<8x128xbf16>, vector<128x16xbf16>, vector<8x16xf32> -> vector<8x16xf32>
    %c0_16 = arith.constant 0 : index
    %c0_17 = arith.constant 0 : index
    %38 = vector.load %arg3[%c0_16, %c0_17] : memref<8x16xf32, #tpu.memory_space<vmem>>, vector<8x16xf32>
    tpu.vector_store %arg3[%c0_16, %c0_17], %37 {strides = array<i32>} : memref<8x16xf32, #tpu.memory_space<vmem>>, vector<8x16xf32>,
    return
  }
}

</mosaic_0001>

<llo_original>
// kernel: tpu_custom_call.1
$region0: #{tpu_custom_call.1}
  #allocation0 [shape = 'u32[]', space=smem, size = 0x4, offset = 0x4, fixed_abs, tag = 'smem constant byte address 0x4 - core index']
  #allocation1 [shape = 'u32[144,128]{1,0:T(1,128)}', space=vmem, size = 0x12000, scoped, tag = 'internal scratch']
  %s0 = inlined_call_operand.vmem [shape: f32[16,4], index: 0, kind: input, shape index: {}]
  %s1 = inlined_call_operand.hbm [shape: bf16[320,128], index: 1, kind: input, shape index: {}]
  %s2 = inlined_call_operand.vmem [shape: f32[3,128], index: 2, kind: input, shape index: {}]
  %s3 = inlined_call_operand.hbm [shape: f32[8,16], index: 3, kind: output, shape index: {}]
  %s4 = sld [smem:[#allocation0]]
  $region26: #{tpu_custom_call.1} parent=0
    _
  %s6 = ssub.s32 1, %s4
  %s7 = scalar_select 0, %s6, %s4
  $region1: #{tpu_custom_call.1} parent=0
    #allocation2 [shape = 'u8[81920]{0}', space=vmem, size = 0x14000, scoped, tag = 'input window, operand 1, single buffered']
    #allocation3 [shape = 's32[1]{0}', space=sflag, size = 0x4, scoped, tag = 'scoped memory for tpu_custom_call.1']
    #allocation4 [shape = 's32[1]{0}', space=sflag, size = 0x4, scoped, tag = 'scoped memory for tpu_custom_call.1']
    #allocation5 [shape = 'u8[4096]{0}', space=vmem, size = 0x1000, scoped, tag = 'output window, operand 0, single buffered']
    %8 = vsyncpa [#allocation3], 0
    %9 = vsyncpa [#allocation4], 0
    // Predicated region
    $region2: #{tpu_custom_call.1} parent=1 // pred_check
      _
    $region3: #{tpu_custom_call.1} parent=1 // pred_check_branch
      %11 = sbr.rel (0) target = $region5
    $region4: #{tpu_custom_call.1} parent=1 // pred_region
      _
    $region5: #{tpu_custom_call.1} parent=1 // pred_fallthru
      _
    // Predicated region
    $region6: #{tpu_custom_call.1} parent=1 // pred_check
      _
    $region7: #{tpu_custom_call.1} parent=1 // pred_check_branch
      %13 = sbr.rel (0) target = $region9
    $region8: #{tpu_custom_call.1} parent=1 // pred_region
      %s15 = ssub.s32 2560, 2560
      %16 = vsyncadd [#allocation3], %s15
      %s17 = sshll.u32 [#allocation2], 4
      %s18 = int_to_ptr.vmem [resolvable:$true] %s17
      %23 = dma.hbm_to_vmem [thread:$0]  %s1, 2560, %s18, [#allocation3], 64, 64, 4
    $region9: #{tpu_custom_call.1} parent=1 // pred_fallthru
      _
    // Predicated region
    $region10: #{tpu_custom_call.1} parent=1 // pred_check
      _
    $region11: #{tpu_custom_call.1} parent=1 // pred_check_branch
      %25 = sbr.rel (0) target = $region13
    $region12: #{tpu_custom_call.1} parent=1 // pred_region
      _
    $region13: #{tpu_custom_call.1} parent=1 // pred_fallthru
      _
    // Predicated region
    $region14: #{tpu_custom_call.1} parent=1 // pred_check
      _
    $region15: #{tpu_custom_call.1} parent=1 // pred_check_branch
      %27 = sbr.rel (0) target = $region17
    $region16: #{tpu_custom_call.1} parent=1 // pred_region
      %28 = dma.done [#allocation3], 2560
    $region17: #{tpu_custom_call.1} parent=1 // pred_fallthru
      _
    %v30 = vld [vmem:[#allocation2 + $0x90] sm:$0x3]
    %v31 = vld [vmem:[%s0] sm:$0xff]
    %v32 = vld [vmem:[%s0 + $0x8] sm:$0xff]
    %v33 = vpack.c.bf16 %v32, %v31
    %v34 = vld [vmem:[%s2] sm:$0x1]
    %v35 = vlaneseq
    %v36 = vshrl.u32 %v35, 7
    %v37 = vsub.s32 0, %v36
    %v38 = vrot.slane %v34, %v37
    %vm39 = vcmask 31744
    %v41 = vsel %vm39, %v33, 0
    %vm43 = vcmask 1041408
    %v45 = vsel %vm43, %v30, 0
    %47 = vmatprep.subr.bf16.mxu0 0
    %48 = vmatpush1.bf16.msra.mxu0 %v45
    %49 = vmatprep.subr.bf16.mxu0 0
    %50 = vmatpush1.bf16.msra.mxu0 0
    %51 = vmatprep.subr.bf16.mxu0 0
    %52 = vmatpush1.bf16.msra.mxu0 0
    %53 = vmatprep.subr.bf16.mxu0 0
    %54 = vmatpush1.bf16.msra.mxu0 0
    %55 = vmatprep.subr.bf16.mxu0 0
    %56 = vmatpush1.bf16.msra.mxu0 0
    %57 = vmatprep.subr.bf16.mxu0 0
    %58 = vmatpush1.bf16.msra.mxu0 0
    %59 = vmatprep.subr.bf16.mxu0 0
    %60 = vmatpush1.bf16.msra.mxu0 0
    %61 = vmatprep.subr.bf16.mxu0 0
    %62 = vmatpush1.bf16.msra.mxu0 0
    %63 = vmatprep.subr.bf16.mxu0 0
    %64 = vmatpush1.bf16.msra.mxu0 0
    %65 = vmatprep.subr.bf16.mxu0 0
    %66 = vmatpush1.bf16.msra.mxu0 0
    %67 = vmatprep.subr.bf16.mxu0 0
    %68 = vmatpush1.bf16.msra.mxu0 0
    %69 = vmatprep.subr.bf16.mxu0 0
    %70 = vmatpush1.bf16.msra.mxu0 0
    %71 = vmatprep.subr.bf16.mxu0 0
    %72 = vmatpush1.bf16.msra.mxu0 0
    %73 = vmatprep.subr.bf16.mxu0 0
    %74 = vmatpush1.bf16.msra.mxu0 0
    %75 = vmatprep.subr.bf16.mxu0 0
    %76 = vmatpush1.bf16.msra.mxu0 0
    %77 = vmatprep.subr.bf16.mxu0 0
    %78 = vmatpush1.bf16.msra.mxu0 0
    %79 = vmatprep.mubr.bf16.mxu0 0
    %80 = vmatmul.mubr.bf16.gmra.mrb[0].mxu0 %v41
    %v81 = vpop.f32.mrb[0].mxu0
    %v82 = vadd.f32 %v38, %v81
    %v83 = vpop.f32.mrb[0].mxu0
    %v84 = vpop.f32.mrb[0].mxu0
    %v85 = vadd.f32 %v38, %v84
    %v86 = vpop.f32.mrb[0].mxu0
    %87 = vdwg.mxu0
    %v88 = vxor.u32 %v82, 2147483648
    %v89 = vxor.u32 %v85, 2147483648
    %v90 = vmul.f32 %v88, 1.442695
    %v91 = vpow.pop %v90
    %v92 = vmul.f32 %v89, 1.442695
    %v93 = vpow.pop %v92
    %v94 = vadd.f32 %v91, 1.0
    %v95 = vadd.f32 %v93, 1.0
    %v96 = vrcp.pop %v94
    %v97 = vmul.f32 1.0, %v96
    %v98 = vrcp.pop %v95
    %v99 = vmul.f32 1.0, %v98
    %v100 = vld [vmem:[#allocation2] sm:$0xf]
    %v101 = vld [vmem:[#allocation2 + $0x4] sm:$0xf]
    %v102 = vld [vmem:[#allocation2 + $0x8] sm:$0xf]
    %v103 = vld [vmem:[#allocation2 + $0xc] sm:$0xf]
    %v104 = vld [vmem:[#allocation2 + $0x10] sm:$0xf]
    %v105 = vld [vmem:[#allocation2 + $0x14] sm:$0xf]
    %v106 = vld [vmem:[#allocation2 + $0x18] sm:$0xf]
    %v107 = vld [vmem:[#allocation2 + $0x1c] sm:$0xf]
    %v108 = vld [vmem:[#allocation2 + $0x20] sm:$0xf]
    %v109 = vld [vmem:[#allocation2 + $0x24] sm:$0xf]
    %v110 = vld [vmem:[#allocation2 + $0x28] sm:$0xf]
    %v111 = vld [vmem:[#allocation2 + $0x2c] sm:$0xf]
    %v112 = vld [vmem:[#allocation2 + $0x30] sm:$0xf]
    %v113 = vld [vmem:[#allocation2 + $0x34] sm:$0xf]
    %v114 = vld [vmem:[#allocation2 + $0x38] sm:$0xf]
    %v115 = vld [vmem:[#allocation2 + $0x3c] sm:$0xf]
    %v116 = vpack.c.bf16 %v99, %v97
    %v117 = vld [vmem:[%s2 + $0x1] sm:$0x1]
    %v118 = vlaneseq
    %v119 = vshrl.u32 %v118, 7
    %v120 = vsub.s32 0, %v119
    %v121 = vrot.slane %v117, %v120
    %v138 = vunpack.c.l.b16 %v100
    %v139 = vunpack.c.l.b16 %v101
    %v140 = vunpack.c.l.b16 %v102
    %v141 = vunpack.c.l.b16 %v103
    %v142 = vunpack.c.l.b16 %v104
    %v143 = vunpack.c.l.b16 %v105
    %v144 = vunpack.c.l.b16 %v106
    %v145 = vunpack.c.l.b16 %v107
    %v146 = vunpack.c.l.b16 %v108
    %v147 = vunpack.c.l.b16 %v109
    %v148 = vunpack.c.l.b16 %v110
    %v149 = vunpack.c.l.b16 %v111
    %v150 = vunpack.c.l.b16 %v112
    %v151 = vunpack.c.l.b16 %v113
    %v152 = vunpack.c.l.b16 %v114
    %v153 = vunpack.c.l.b16 %v115
    %v154 = vpack.c.b16 %v139, %v138
    %v155 = vpack.c.b16 %v141, %v140
    %v156 = vpack.c.b16 %v143, %v142
    %v157 = vpack.c.b16 %v145, %v144
    %v158 = vpack.c.b16 %v147, %v146
    %v159 = vpack.c.b16 %v149, %v148
    %v160 = vpack.c.b16 %v151, %v150
    %v161 = vpack.c.b16 %v153, %v152
    %170 = vmatprep.subr.bf16.mxu0 0
    %171 = vmatpush1.bf16.msra.mxu0 %v154
    %172 = vmatprep.subr.bf16.mxu0 0
    %173 = vmatpush1.bf16.msra.mxu0 %v155
    %174 = vmatprep.subr.bf16.mxu0 0
    %175 = vmatpush1.bf16.msra.mxu0 %v156
    %176 = vmatprep.subr.bf16.mxu0 0
    %177 = vmatpush1.bf16.msra.mxu0 %v157
    %178 = vmatprep.subr.bf16.mxu0 0
    %179 = vmatpush1.bf16.msra.mxu0 %v158
    %180 = vmatprep.subr.bf16.mxu0 0
    %181 = vmatpush1.bf16.msra.mxu0 %v159
    %182 = vmatprep.subr.bf16.mxu0 0
    %183 = vmatpush1.bf16.msra.mxu0 %v160
    %184 = vmatprep.subr.bf16.mxu0 0
    %185 = vmatpush1.bf16.msra.mxu0 %v161
    %186 = vmatprep.subr.bf16.mxu0 0
    %187 = vmatpush1.bf16.msra.mxu0 0
    %188 = vmatprep.subr.bf16.mxu0 0
    %189 = vmatpush1.bf16.msra.mxu0 0
    %190 = vmatprep.subr.bf16.mxu0 0
    %191 = vmatpush1.bf16.msra.mxu0 0
    %192 = vmatprep.subr.bf16.mxu0 0
    %193 = vmatpush1.bf16.msra.mxu0 0
    %194 = vmatprep.subr.bf16.mxu0 0
    %195 = vmatpush1.bf16.msra.mxu0 0
    %196 = vmatprep.subr.bf16.mxu0 0
    %197 = vmatpush1.bf16.msra.mxu0 0
    %198 = vmatprep.subr.bf16.mxu0 0
    %199 = vmatpush1.bf16.msra.mxu0 0
    %200 = vmatprep.subr.bf16.mxu0 0
    %201 = vmatpush1.bf16.msra.mxu0 0
    %202 = vmatprep.mubr.bf16.mxu0 0
    %203 = vmatmul.mubr.bf16.gmra.mrb[0].mxu0 %v116
    %v204 = vpop.f32.mrb[0].mxu0
    %v205 = vadd.f32 %v121, %v204
    %v206 = vpop.f32.mrb[0].mxu0
    %v207 = vpop.f32.mrb[0].mxu0
    %v208 = vadd.f32 %v121, %v207
    %v209 = vpop.f32.mrb[0].mxu0
    %210 = vdwg.mxu0
    %v211 = vxor.u32 %v205, 2147483648
    %v212 = vxor.u32 %v208, 2147483648
    %v213 = vmul.f32 %v211, 1.442695
    %v214 = vpow.pop %v213
    %v215 = vmul.f32 %v212, 1.442695
    %v216 = vpow.pop %v215
    %v217 = vadd.f32 %v214, 1.0
    %v218 = vadd.f32 %v216, 1.0
    %v219 = vrcp.pop %v217
    %v220 = vmul.f32 1.0, %v219
    %v221 = vrcp.pop %v218
    %v222 = vmul.f32 1.0, %v221
    %v223 = vld [vmem:[#allocation2 + $0x40] sm:$0xf]
    %v224 = vld [vmem:[#allocation2 + $0x44] sm:$0xf]
    %v225 = vld [vmem:[#allocation2 + $0x48] sm:$0xf]
    %v226 = vld [vmem:[#allocation2 + $0x4c] sm:$0xf]
    %v227 = vld [vmem:[#allocation2 + $0x50] sm:$0xf]
    %v228 = vld [vmem:[#allocation2 + $0x54] sm:$0xf]
    %v229 = vld [vmem:[#allocation2 + $0x58] sm:$0xf]
    %v230 = vld [vmem:[#allocation2 + $0x5c] sm:$0xf]
    %v231 = vld [vmem:[#allocation2 + $0x60] sm:$0xf]
    %v232 = vld [vmem:[#allocation2 + $0x64] sm:$0xf]
    %v233 = vld [vmem:[#allocation2 + $0x68] sm:$0xf]
    %v234 = vld [vmem:[#allocation2 + $0x6c] sm:$0xf]
    %v235 = vld [vmem:[#allocation2 + $0x70] sm:$0xf]
    %v236 = vld [vmem:[#allocation2 + $0x74] sm:$0xf]
    %v237 = vld [vmem:[#allocation2 + $0x78] sm:$0xf]
    %v238 = vld [vmem:[#allocation2 + $0x7c] sm:$0xf]
    %v239 = vpack.c.bf16 %v222, %v220
    %v240 = vld [vmem:[%s2 + $0x2] sm:$0x1]
    %v241 = vlaneseq
    %v242 = vshrl.u32 %v241, 7
    %v243 = vsub.s32 0, %v242
    %v244 = vrot.slane %v240, %v243
    %v261 = vunpack.c.l.b16 %v223
    %v262 = vunpack.c.l.b16 %v224
    %v263 = vunpack.c.l.b16 %v225
    %v264 = vunpack.c.l.b16 %v226
    %v265 = vunpack.c.l.b16 %v227
    %v266 = vunpack.c.l.b16 %v228
    %v267 = vunpack.c.l.b16 %v229
    %v268 = vunpack.c.l.b16 %v230
    %v269 = vunpack.c.l.b16 %v231
    %v270 = vunpack.c.l.b16 %v232
    %v271 = vunpack.c.l.b16 %v233
    %v272 = vunpack.c.l.b16 %v234
    %v273 = vunpack.c.l.b16 %v235
    %v274 = vunpack.c.l.b16 %v236
    %v275 = vunpack.c.l.b16 %v237
    %v276 = vunpack.c.l.b16 %v238
    %v277 = vpack.c.b16 %v262, %v261
    %v278 = vpack.c.b16 %v264, %v263
    %v279 = vpack.c.b16 %v266, %v265
    %v280 = vpack.c.b16 %v268, %v267
    %v281 = vpack.c.b16 %v270, %v269
    %v282 = vpack.c.b16 %v272, %v271
    %v283 = vpack.c.b16 %v274, %v273
    %v284 = vpack.c.b16 %v276, %v275
    %293 = vmatprep.subr.bf16.mxu0 0
    %294 = vmatpush1.bf16.msra.mxu0 %v277
    %295 = vmatprep.subr.bf16.mxu0 0
    %296 = vmatpush1.bf16.msra.mxu0 %v278
    %297 = vmatprep.subr.bf16.mxu0 0
    %298 = vmatpush1.bf16.msra.mxu0 %v279
    %299 = vmatprep.subr.bf16.mxu0 0
    %300 = vmatpush1.bf16.msra.mxu0 %v280
    %301 = vmatprep.subr.bf16.mxu0 0
    %302 = vmatpush1.bf16.msra.mxu0 %v281
    %303 = vmatprep.subr.bf16.mxu0 0
    %304 = vmatpush1.bf16.msra.mxu0 %v282
    %305 = vmatprep.subr.bf16.mxu0 0
    %306 = vmatpush1.bf16.msra.mxu0 %v283
    %307 = vmatprep.subr.bf16.mxu0 0
    %308 = vmatpush1.bf16.msra.mxu0 %v284
    %309 = vmatprep.subr.bf16.mxu0 0
    %310 = vmatpush1.bf16.msra.mxu0 0
    %311 = vmatprep.subr.bf16.mxu0 0
    %312 = vmatpush1.bf16.msra.mxu0 0
    %313 = vmatprep.subr.bf16.mxu0 0
    %314 = vmatpush1.bf16.msra.mxu0 0
    %315 = vmatprep.subr.bf16.mxu0 0
    %316 = vmatpush1.bf16.msra.mxu0 0
    %317 = vmatprep.subr.bf16.mxu0 0
    %318 = vmatpush1.bf16.msra.mxu0 0
    %319 = vmatprep.subr.bf16.mxu0 0
    %320 = vmatpush1.bf16.msra.mxu0 0
    %321 = vmatprep.subr.bf16.mxu0 0
    %322 = vmatpush1.bf16.msra.mxu0 0
    %323 = vmatprep.subr.bf16.mxu0 0
    %324 = vmatpush1.bf16.msra.mxu0 0
    %325 = vmatprep.mubr.bf16.mxu0 0
    %326 = vmatmul.mubr.bf16.gmra.mrb[0].mxu0 %v239
    %v327 = vpop.f32.mrb[0].mxu0
    %v328 = vadd.f32 %v244, %v327
    %v329 = vpop.f32.mrb[0].mxu0
    %v330 = vpop.f32.mrb[0].mxu0
    %v331 = vadd.f32 %v244, %v330
    %v332 = vpop.f32.mrb[0].mxu0
    %333 = vdwg.mxu0
    %v334 = vxor.u32 %v328, 2147483648
    %v335 = vxor.u32 %v331, 2147483648
    %v336 = vmul.f32 %v334, 1.442695
    %v337 = vpow.pop %v336
    %v338 = vmul.f32 %v335, 1.442695
    %v339 = vpow.pop %v338
    %v340 = vadd.f32 %v337, 1.0
    %v341 = vadd.f32 %v339, 1.0
    %v342 = vrcp.pop %v340
    %v343 = vmul.f32 1.0, %v342
    %v344 = vrcp.pop %v341
    %v345 = vmul.f32 1.0, %v344
    %v346 = vld [vmem:[#allocation2 + $0x80] sm:$0xf]
    %347 = vxpose.xlu0.b32.start [1/16] %v343, 128
    %348 = vxpose.xlu0.b32.cont [2/16] %v345, 128
    %349 = vxpose.xlu0.b32.cont [3/16] 0.0, 128
    %350 = vxpose.xlu0.b32.cont [4/16] 0.0, 128
    %351 = vxpose.xlu0.b32.cont [5/16] 0.0, 128
    %352 = vxpose.xlu0.b32.cont [6/16] 0.0, 128
    %353 = vxpose.xlu0.b32.cont [7/16] 0.0, 128
    %354 = vxpose.xlu0.b32.cont [8/16] 0.0, 128
    %355 = vxpose.xlu0.b32.cont [9/16] 0.0, 128
    %356 = vxpose.xlu0.b32.cont [10/16] 0.0, 128
    %357 = vxpose.xlu0.b32.cont [11/16] 0.0, 128
    %358 = vxpose.xlu0.b32.cont [12/16] 0.0, 128
    %359 = vxpose.xlu0.b32.cont [13/16] 0.0, 128
    %360 = vxpose.xlu0.b32.cont [14/16] 0.0, 128
    %361 = vxpose.xlu0.b32.cont [15/16] 0.0, 128
    %362 = vxpose.xlu0.b32.end [16/16] 0.0, 128
    %v363 = vpop.trf.xlu0
    %v364 = vpop.trf.xlu0
    %v365 = vpop.trf.xlu0
    %v366 = vpop.trf.xlu0
    %v367 = vpop.trf.xlu0
    %v368 = vpop.trf.xlu0
    %v369 = vpop.trf.xlu0
    %v370 = vpop.trf.xlu0
    %v371 = vpop.trf.xlu0
    %v372 = vpop.trf.xlu0
    %v373 = vpop.trf.xlu0
    %v374 = vpop.trf.xlu0
    %v375 = vpop.trf.xlu0
    %v376 = vpop.trf.xlu0
    %v377 = vpop.trf.xlu0
    %v378 = vpop.trf.xlu0
    %v379 = vpack.c.bf16 %v364, %v363
    %v380 = vpack.c.bf16 %v366, %v365
    %v381 = vpack.c.bf16 %v368, %v367
    %v382 = vpack.c.bf16 %v370, %v369
    %v383 = vpack.c.bf16 %v372, %v371
    %v384 = vpack.c.bf16 %v374, %v373
    %v385 = vpack.c.bf16 %v376, %v375
    %v386 = vpack.c.bf16 %v378, %v377
    %387 = vmatprep.subr.bf16.mxu0 0
    %388 = vmatpush1.bf16.msra.mxu0 %v379
    %389 = vmatprep.subr.bf16.mxu0 0
    %390 = vmatpush1.bf16.msra.mxu0 %v380
    %391 = vmatprep.subr.bf16.mxu0 0
    %392 = vmatpush1.bf16.msra.mxu0 %v381
    %393 = vmatprep.subr.bf16.mxu0 0
    %394 = vmatpush1.bf16.msra.mxu0 %v382
    %395 = vmatprep.subr.bf16.mxu0 0
    %396 = vmatpush1.bf16.msra.mxu0 %v383
    %397 = vmatprep.subr.bf16.mxu0 0
    %398 = vmatpush1.bf16.msra.mxu0 %v384
    %399 = vmatprep.subr.bf16.mxu0 0
    %400 = vmatpush1.bf16.msra.mxu0 %v385
    %401 = vmatprep.subr.bf16.mxu0 0
    %402 = vmatpush1.bf16.msra.mxu0 %v386
    %403 = vmatprep.subr.bf16.mxu0 0
    %404 = vmatpush1.bf16.msra.mxu0 0
    %405 = vmatprep.subr.bf16.mxu0 0
    %406 = vmatpush1.bf16.msra.mxu0 0
    %407 = vmatprep.subr.bf16.mxu0 0
    %408 = vmatpush1.bf16.msra.mxu0 0
    %409 = vmatprep.subr.bf16.mxu0 0
    %410 = vmatpush1.bf16.msra.mxu0 0
    %411 = vmatprep.subr.bf16.mxu0 0
    %412 = vmatpush1.bf16.msra.mxu0 0
    %413 = vmatprep.subr.bf16.mxu0 0
    %414 = vmatpush1.bf16.msra.mxu0 0
    %415 = vmatprep.subr.bf16.mxu0 0
    %416 = vmatpush1.bf16.msra.mxu0 0
    %417 = vmatprep.subr.bf16.mxu0 0
    %418 = vmatpush1.bf16.msra.mxu0 0
    %419 = vmatprep.mubr.bf16.mxu0 0
    %420 = vmatmul.mubr.bf16.gmra.mrb[0].mxu0 %v346
    %v421 = vpop.f32.mrb[0].mxu0
    %v422 = vadd.f32 0.0, %v421
    %v423 = vpop.f32.mrb[0].mxu0
    %v424 = vpop.f32.mrb[0].mxu0
    %v425 = vpop.f32.mrb[0].mxu0
    %426 = vdwg.mxu0
    %vm427 = vcmask 130048
    %428 = vst.msk [vmem:[#allocation5] sm:$0xff] %vm427, %v422
    // Predicated region
    $region18: #{tpu_custom_call.1} parent=1 // pred_check
      _
    $region19: #{tpu_custom_call.1} parent=1 // pred_check_branch
      %430 = sbr.rel (0) target = $region21
    $region20: #{tpu_custom_call.1} parent=1 // pred_region
      %s432 = ssub.s32 128, 128
      %433 = vsyncadd [#allocation4], %s432
      %s435 = sshll.u32 [#allocation5], 4
      %s436 = int_to_ptr.vmem [resolvable:$true] %s435
      %438 = dma.vmem_to_hbm [thread:$0]  %s436, 128, %s3, [#allocation4]
    $region21: #{tpu_custom_call.1} parent=1 // pred_fallthru
      _
    // Predicated region
    $region22: #{tpu_custom_call.1} parent=1 // pred_check
      _
    $region23: #{tpu_custom_call.1} parent=1 // pred_check_branch
      %440 = sbr.rel (0) target = $region25
    $region24: #{tpu_custom_call.1} parent=1 // pred_region
      %441 = dma.done [#allocation4], 128
    $region25: #{tpu_custom_call.1} parent=1 // pred_fallthru
      _
    %442 = vsyncpa [#allocation3], 1
    %443 = vsyncpa [#allocation4], 1

</llo_original>
